<compile_context>
chip_gen: v5e
topology: v5e:2x2
jax: 0.10.0
libtpu: 0.0.40
codegen_flags: <defaults>
</compile_context>

<pallas_src>
import math
import functools

import jax
import jax.numpy as jnp
from jax.experimental import pallas as pl
from jax.experimental.pallas import tpu as pltpu


def _sdpa_dropout_kernel(q_ref, k_ref, v_ref, *rest, scale, keep_threshold,
                         keep_scale, apply_dropout):
    if apply_dropout:
        bits_ref, o_ref = rest
    else:
        (o_ref,) = rest

    # Fold the constant scale into q: touches (TB, S, D) instead of (TB, S, S).
    q = q_ref[...].astype(jnp.float32) * scale
    k = k_ref[...].astype(jnp.float32)
    v = v_ref[...].astype(jnp.float32)

    # Batched q @ k^T without materializing a transpose of k.
    scores = jax.lax.dot_general(
        q, k,
        dimension_numbers=(((2,), (2,)), ((0,), (0,))),
        preferred_element_type=jnp.float32)                 # (TB, S, S)

    # Numerically stable softmax over the last dim.
    m = jnp.max(scores, axis=-1, keepdims=True)
    e = jnp.exp(scores - m)
    denom = jnp.sum(e, axis=-1, keepdims=True)
    # NOTE: pl.reciprocal(denom, approx=True) would push this to the EUP on
    # real TPU; plain divide keeps the kernel interpret-mode compatible.
    probs = e / denom

    if apply_dropout:
        # Integer-domain threshold: bits are uniform int32; keep iff
        # bits >= keep_threshold  ==>  P(keep) = 1 - dropout_p.
        keep = bits_ref[...] >= keep_threshold
        probs = jnp.where(keep, probs, 0.0)

    out = jax.lax.dot_general(
        probs, v,
        dimension_numbers=(((2,), (1,)), ((0,), (0,))),
        preferred_element_type=jnp.float32)                 # (TB, S, D)

    if apply_dropout:
        # Fold the 1/(1-p) survivor scale into the (S, D) output instead of
        # the (S, S) probability tile.
        out = out * keep_scale

    o_ref[...] = out.astype(o_ref.dtype)


def _pick_head_tile(bh, s, d, budget_bytes=4 * 1024 * 1024):
    # Rough VMEM per head (double-buffered): q, k, v, out (S*D f32) + bits.
    per_head = (4 * s * d + s * s) * 4 * 2
    tb = max(1, min(bh, budget_bytes // per_head))
    while bh % tb:          # keep the tile an exact divisor of BH
        tb -= 1
    return tb


def sdpa_dropout(query, key, value, *, dropout_p=0.5,
                 inv_scale_factor=1.0 / math.sqrt(8), rng_key=None):
    """query/key/value: [B, H, S, D]. Returns [B, H, S, D] (same dtype)."""
    B, H, S, D = query.shape
    BH = B * H

    if dropout_p >= 1.0:          # everything dropped
        return jnp.zeros_like(query)

    apply_dropout = dropout_p > 0.0
    scale = 1.0 / float(inv_scale_factor)          # matches torch's .div()
    keep_scale = 1.0 / (1.0 - dropout_p) if apply_dropout else 1.0
    # Signed-int32 threshold such that P(bits >= thr) == 1 - dropout_p.
    keep_threshold = int(round(dropout_p * 4294967296.0)) - 2147483648

    qf = query.reshape(BH, S, D)
    kf = key.reshape(BH, S, D)
    vf = value.reshape(BH, S, D)

    tb = _pick_head_tile(BH, S, D)
    grid = (BH // tb,)

    qkv_spec = pl.BlockSpec((tb, S, D), lambda b: (b, 0, 0))
    in_specs = [qkv_spec, qkv_spec, qkv_spec]
    inputs = [qf, kf, vf]

    if apply_dropout:
        if rng_key is None:
            rng_key = jax.random.PRNGKey(0)
        bits = jax.lax.bitcast_convert_type(
            jax.random.bits(rng_key, (BH, S, S), dtype=jnp.uint32), jnp.int32)
        in_specs.append(pl.BlockSpec((tb, S, S), lambda b: (b, 0, 0)))
        inputs.append(bits)

    kernel = functools.partial(
        _sdpa_dropout_kernel, scale=scale, keep_threshold=keep_threshold,
        keep_scale=keep_scale, apply_dropout=apply_dropout)

    out = pl.pallas_call(
        kernel,
        out_shape=jax.ShapeDtypeStruct((BH, S, D), query.dtype),
        grid_spec=pltpu.PrefetchScalarGridSpec(
            num_scalar_prefetch=0,
            grid=grid,
            in_specs=in_specs,
            out_specs=pl.BlockSpec((tb, S, D), lambda b: (b, 0, 0)),
        ),
        compiler_params=pltpu.CompilerParams(
            dimension_semantics=("parallel",)),
    )(*inputs)

    return out.reshape(B, H, S, D)


if __name__ == "__main__":
    B, H, S, D = 2, 4, 8, 16
    root = jax.random.PRNGKey(0)
    kq, kk, kv, kd = jax.random.split(root, 4)
    q = jax.random.normal(kq, (B, H, S, D), dtype=jnp.float32)
    k = jax.random.normal(kk, (B, H, S, D), dtype=jnp.float32)
    v = jax.random.normal(kv, (B, H, S, D), dtype=jnp.float32)

    inv_scale = 1.0 / math.sqrt(8)

    # Forward pass with dropout (training semantics, p=0.5).
    out = sdpa_dropout(q, k, v, dropout_p=0.5, inv_scale_factor=inv_scale,
                       rng_key=kd)
    jax.block_until_ready(out)
    assert out.shape == (B, H, S, D)
    assert bool(jnp.all(jnp.isfinite(out)))

    # Sanity check against a pure-JAX reference with dropout disabled
    # (dropout randomness need not be bit-identical to any framework).
    out_nodrop = sdpa_dropout(q, k, v, dropout_p=0.0,
                              inv_scale_factor=inv_scale, rng_key=kd)
    with jax.default_matmul_precision("highest"):
        scores = jnp.einsum("bhqd,bhkd->bhqk", q, k) / inv_scale
        ref = jnp.einsum("bhqk,bhkd->bhqd",
                         jax.nn.softmax(scores, axis=-1), v)
    err = float(jnp.max(jnp.abs(out_nodrop - ref)))
    assert bool(jnp.allclose(out_nodrop, ref, atol=1e-4, rtol=1e-4)), err

    print("KERNEL_OK")
</pallas_src>

<mosaic_0001>
module attributes {stable_mosaic.version = 11 : i64} {
  func.func @_sdpa_dropout_kernel(%arg0: i32, %arg1: memref<8x8x16xf32, #tpu.memory_space<vmem>>, %arg2: memref<8x8x16xf32, #tpu.memory_space<vmem>>, %arg3: memref<8x8x16xf32, #tpu.memory_space<vmem>>, %arg4: memref<8x8x8xi32, #tpu.memory_space<vmem>>, %arg5: memref<8x8x16xf32, #tpu.memory_space<vmem>>) attributes {dimension_semantics = [#tpu.dimension_semantics<parallel>], iteration_bounds = array<i64: 1>, scalar_prefetch = 0 : i64, scratch_operands = 0 : i64, tpu.core_type = #tpu.core_type<tc>, window_params = [{transform_indices = @transform_0, window_bounds = array<i64: 8, 8, 16>}, {transform_indices = @transform_1, window_bounds = array<i64: 8, 8, 16>}, {transform_indices = @transform_2, window_bounds = array<i64: 8, 8, 16>}, {transform_indices = @transform_3, window_bounds = array<i64: 8, 8, 8>}, {transform_indices = @transform_4, window_bounds = array<i64: 8, 8, 16>}]} {
    %c0 = arith.constant 0 : index
    %c0_0 = arith.constant 0 : index
    %c0_1 = arith.constant 0 : index
    %0 = vector.load %arg1[%c0, %c0_0, %c0_1] : memref<8x8x16xf32, #tpu.memory_space<vmem>>, vector<8x8x16xf32>
    %cst = arith.constant 2.82842708 : f32
    %1 = vector.broadcast %cst : f32 to vector<8x8x16xf32>
    %2 = arith.mulf %0, %1 : vector<8x8x16xf32>
    %c0_2 = arith.constant 0 : index
    %c0_3 = arith.constant 0 : index
    %c0_4 = arith.constant 0 : index
    %3 = vector.load %arg2[%c0_2, %c0_3, %c0_4] : memref<8x8x16xf32, #tpu.memory_space<vmem>>, vector<8x8x16xf32>
    %c0_5 = arith.constant 0 : index
    %c0_6 = arith.constant 0 : index
    %c0_7 = arith.constant 0 : index
    %4 = vector.load %arg3[%c0_5, %c0_6, %c0_7] : memref<8x8x16xf32, #tpu.memory_space<vmem>>, vector<8x8x16xf32>
    %cst_8 = arith.constant dense<0.000000e+00> : vector<8x8x8xf32>
    %5 = tpu.matmul %2, %3, %cst_8 {dimension_numbers = #tpu.dot_dimension_numbers<[2], [2], [1], [1], [0, 0, 0, 1, 1, 1], [0], [0]>} : vector<8x8x16xf32>, vector<8x8x16xf32>, vector<8x8x8xf32> -> vector<8x8x8xf32>
    %cst_9 = arith.constant dense<0xFF800000> : vector<8x8xf32>
    %6 = vector.multi_reduction <maximumf>, %5, %cst_9 [2] : vector<8x8x8xf32> to vector<8x8xf32>
    %7 = vector.shape_cast %6 : vector<8x8xf32> to vector<8x8x1xf32>
    %8 = vector.broadcast %7 : vector<8x8x1xf32> to vector<8x8x8xf32>
    %9 = arith.subf %5, %8 : vector<8x8x8xf32>
    %10 = math.exp %9 : vector<8x8x8xf32>
    %cst_10 = arith.constant dense<0.000000e+00> : vector<8x8xf32>
    %11 = vector.multi_reduction <add>, %10, %cst_10 [2] : vector<8x8x8xf32> to vector<8x8xf32>
    %12 = vector.shape_cast %11 : vector<8x8xf32> to vector<8x8x1xf32>
    %13 = vector.broadcast %12 : vector<8x8x1xf32> to vector<8x8x8xf32>
    %14 = arith.divf %10, %13 : vector<8x8x8xf32>
    %c0_11 = arith.constant 0 : index
    %c0_12 = arith.constant 0 : index
    %c0_13 = arith.constant 0 : index
    %15 = vector.load %arg4[%c0_11, %c0_12, %c0_13] : memref<8x8x8xi32, #tpu.memory_space<vmem>>, vector<8x8x8xi32>
    %c0_i32 = arith.constant 0 : i32
    %16 = vector.broadcast %c0_i32 : i32 to vector<8x8x8xi32>
    %17 = arith.cmpi sge, %15, %16 : vector<8x8x8xi32>
    %cst_14 = arith.constant 0.000000e+00 : f32
    %18 = vector.broadcast %cst_14 : f32 to vector<8x8x8xf32>
    %19 = arith.select %17, %14, %18 : vector<8x8x8xi1>, vector<8x8x8xf32>
    %cst_15 = arith.constant dense<0.000000e+00> : vector<8x8x16xf32>
    %20 = tpu.matmul %19, %4, %cst_15 {dimension_numbers = #tpu.dot_dimension_numbers<[2], [1], [1], [2], [0, 0, 0, 1, 1, 2], [0], [0]>} : vector<8x8x8xf32>, vector<8x8x16xf32>, vector<8x8x16xf32> -> vector<8x8x16xf32>
    %cst_16 = arith.constant 2.000000e+00 : f32
    %21 = vector.broadcast %cst_16 : f32 to vector<8x8x16xf32>
    %22 = arith.mulf %20, %21 : vector<8x8x16xf32>
    %c0_17 = arith.constant 0 : index
    %c0_18 = arith.constant 0 : index
    %c0_19 = arith.constant 0 : index
    %23 = vector.load %arg5[%c0_17, %c0_18, %c0_19] : memref<8x8x16xf32, #tpu.memory_space<vmem>>, vector<8x8x16xf32>
    tpu.vector_store %arg5[%c0_17, %c0_18, %c0_19], %22 {strides = array<i32>} : memref<8x8x16xf32, #tpu.memory_space<vmem>>, vector<8x8x16xf32>,
    return
  }
  func.func @transform_0(%arg0: i32) -> (i32, i32, i32) {
    %c0_i32 = arith.constant 0 : i32
    %c0_i32_0 = arith.constant 0 : i32
    %c0_i32_1 = arith.constant 0 : i32
    return %arg0, %c0_i32, %c0_i32_0 : i32, i32, i32
  }
  func.func @transform_1(%arg0: i32) -> (i32, i32, i32) {
    %c0_i32 = arith.constant 0 : i32
    %c0_i32_0 = arith.constant 0 : i32
    %c0_i32_1 = arith.constant 0 : i32
    return %arg0, %c0_i32, %c0_i32_0 : i32, i32, i32
  }
  func.func @transform_2(%arg0: i32) -> (i32, i32, i32) {
    %c0_i32 = arith.constant 0 : i32
    %c0_i32_0 = arith.constant 0 : i32
    %c0_i32_1 = arith.constant 0 : i32
    return %arg0, %c0_i32, %c0_i32_0 : i32, i32, i32
  }
  func.func @transform_3(%arg0: i32) -> (i32, i32, i32) {
    %c0_i32 = arith.constant 0 : i32
    %c0_i32_0 = arith.constant 0 : i32
    %c0_i32_1 = arith.constant 0 : i32
    return %arg0, %c0_i32, %c0_i32_0 : i32, i32, i32
  }
  func.func @transform_4(%arg0: i32) -> (i32, i32, i32) {
    %c0_i32 = arith.constant 0 : i32
    %c0_i32_0 = arith.constant 0 : i32
    %c0_i32_1 = arith.constant 0 : i32
    return %arg0, %c0_i32, %c0_i32_0 : i32, i32, i32
  }
}

</mosaic_0001>

<llo_original>
// kernel: tpu_custom_call.1
$region0: #{tpu_custom_call.1}
  #allocation0 [shape = 'u32[]', space=smem, size = 0x4, offset = 0x4, fixed_abs, tag = 'smem constant byte address 0x4 - core index']
  #allocation1 [shape = 'u32[72,128]{1,0:T(1,128)}', space=vmem, size = 0x9000, scoped, tag = 'internal scratch']
  %s0 = inlined_call_operand.hbm [shape: f32[8,8,16], index: 0, kind: input, shape index: {}]
  %s1 = inlined_call_operand.hbm [shape: f32[8,8,16], index: 1, kind: input, shape index: {}]
  %s2 = inlined_call_operand.hbm [shape: f32[8,8,16], index: 2, kind: input, shape index: {}]
  %s3 = inlined_call_operand.hbm [shape: s32[8,8,8], index: 3, kind: input, shape index: {}]
  %s4 = inlined_call_operand.hbm [shape: f32[8,8,16], index: 4, kind: output, shape index: {}]
  %s5 = sld [smem:[#allocation0]]
  $region42: #{tpu_custom_call.1} parent=0
    _
  %s7 = ssub.s32 1, %s5
  %s8 = scalar_select 0, %s7, %s5
  $region1: #{tpu_custom_call.1} parent=0
    #allocation2 [shape = 'u8[32768]{0}', space=vmem, size = 0x8000, scoped, tag = 'input window, operand 0, single buffered']
    #allocation3 [shape = 's32[1]{0}', space=sflag, size = 0x4, scoped, tag = 'scoped memory for tpu_custom_call.1']
    #allocation4 [shape = 's32[1]{0}', space=sflag, size = 0x4, scoped, tag = 'scoped memory for tpu_custom_call.1']
    #allocation5 [shape = 'u8[32768]{0}', space=vmem, size = 0x8000, scoped, tag = 'input window, operand 1, single buffered']
    #allocation6 [shape = 's32[1]{0}', space=sflag, size = 0x4, scoped, tag = 'scoped memory for tpu_custom_call.1']
    #allocation7 [shape = 'u8[32768]{0}', space=vmem, size = 0x8000, scoped, tag = 'input window, operand 2, single buffered']
    #allocation8 [shape = 'u8[32768]{0}', space=vmem, size = 0x8000, scoped, tag = 'input window, operand 3, single buffered']
    #allocation9 [shape = 's32[1]{0}', space=sflag, size = 0x4, scoped, tag = 'scoped memory for tpu_custom_call.1']
    #allocation10 [shape = 'u8[32768]{0}', space=vmem, size = 0x8000, scoped, tag = 'output window, operand 0, single buffered']
    %9 = vsyncpa [#allocation3], 0
    %10 = vsyncpa [#allocation6], 0
    %11 = vsyncpa [#allocation9], 0
    %12 = vsyncpa [#allocation4], 0
    // Predicated region
    $region2: #{tpu_custom_call.1} parent=1 // pred_check
      _
    $region3: #{tpu_custom_call.1} parent=1 // pred_check_branch
      %14 = sbr.rel (0) target = $region5
    $region4: #{tpu_custom_call.1} parent=1 // pred_region
      %16 = vsyncadd [#allocation3], 0
      %s17 = sshll.u32 %s0, 4
      %s18 = int_to_ptr.hbm [resolvable:$true] %s17
      %s19 = sshll.u32 [#allocation2], 4
      %s20 = int_to_ptr.vmem [resolvable:$true] %s19
      %25 = dma.hbm_to_vmem [thread:$0]  %s18, 1024, %s20, [#allocation3], 128, 128, 8
    $region5: #{tpu_custom_call.1} parent=1 // pred_fallthru
      _
    // Predicated region
    $region6: #{tpu_custom_call.1} parent=1 // pred_check
      _
    $region7: #{tpu_custom_call.1} parent=1 // pred_check_branch
      %27 = sbr.rel (0) target = $region9
    $region8: #{tpu_custom_call.1} parent=1 // pred_region
      %29 = vsyncadd [#allocation6], 0
      %s30 = sshll.u32 %s1, 4
      %s31 = int_to_ptr.hbm [resolvable:$true] %s30
      %s32 = sshll.u32 [#allocation5], 4
      %s33 = int_to_ptr.vmem [resolvable:$true] %s32
      %38 = dma.hbm_to_vmem [thread:$0]  %s31, 1024, %s33, [#allocation6], 128, 128, 8
    $region9: #{tpu_custom_call.1} parent=1 // pred_fallthru
      _
    // Predicated region
    $region10: #{tpu_custom_call.1} parent=1 // pred_check
      _
    $region11: #{tpu_custom_call.1} parent=1 // pred_check_branch
      %40 = sbr.rel (0) target = $region13
    $region12: #{tpu_custom_call.1} parent=1 // pred_region
      %42 = vsyncadd [#allocation6], 0
      %s43 = sshll.u32 %s2, 4
      %s44 = int_to_ptr.hbm [resolvable:$true] %s43
      %s45 = sshll.u32 [#allocation7], 4
      %s46 = int_to_ptr.vmem [resolvable:$true] %s45
      %51 = dma.hbm_to_vmem [thread:$0]  %s44, 1024, %s46, [#allocation6], 128, 128, 8
    $region13: #{tpu_custom_call.1} parent=1 // pred_fallthru
      _
    // Predicated region
    $region14: #{tpu_custom_call.1} parent=1 // pred_check
      _
    $region15: #{tpu_custom_call.1} parent=1 // pred_check_branch
      %53 = sbr.rel (0) target = $region17
    $region16: #{tpu_custom_call.1} parent=1 // pred_region
      %55 = vsyncadd [#allocation9], 0
      %s56 = sshll.u32 %s3, 4
      %s57 = int_to_ptr.hbm [resolvable:$true] %s56
      %s58 = sshll.u32 [#allocation8], 4
      %s59 = int_to_ptr.vmem [resolvable:$true] %s58
      %64 = dma.hbm_to_vmem [thread:$0]  %s57, 1024, %s59, [#allocation9], 128, 128, 8
    $region17: #{tpu_custom_call.1} parent=1 // pred_fallthru
      _
    // Predicated region
    $region18: #{tpu_custom_call.1} parent=1 // pred_check
      _
    $region19: #{tpu_custom_call.1} parent=1 // pred_check_branch
      %66 = sbr.rel (0) target = $region21
    $region20: #{tpu_custom_call.1} parent=1 // pred_region
      %68 = dma.done [#allocation3], 1024
    $region21: #{tpu_custom_call.1} parent=1 // pred_fallthru
      _
    // Predicated region
    $region22: #{tpu_custom_call.1} parent=1 // pred_check
      _
    $region23: #{tpu_custom_call.1} parent=1 // pred_check_branch
      %70 = sbr.rel (0) target = $region25
    $region24: #{tpu_custom_call.1} parent=1 // pred_region
      %72 = dma.done [#allocation6], 1024
    $region25: #{tpu_custom_call.1} parent=1 // pred_fallthru
      _
    // Predicated region
    $region26: #{tpu_custom_call.1} parent=1 // pred_check
      _
    $region27: #{tpu_custom_call.1} parent=1 // pred_check_branch
      %74 = sbr.rel (0) target = $region29
    $region28: #{tpu_custom_call.1} parent=1 // pred_region
      %76 = dma.done [#allocation6], 1024
    $region29: #{tpu_custom_call.1} parent=1 // pred_fallthru
      _
    // Predicated region
    $region30: #{tpu_custom_call.1} parent=1 // pred_check
      _
    $region31: #{tpu_custom_call.1} parent=1 // pred_check_branch
      %78 = sbr.rel (0) target = $region33
    $region32: #{tpu_custom_call.1} parent=1 // pred_region
      %80 = dma.done [#allocation9], 1024
    $region33: #{tpu_custom_call.1} parent=1 // pred_fallthru
      _
    %v81 = vld [vmem:[#allocation2] sm:$0xff]
    %v82 = vld [vmem:[#allocation2 + $0x8] sm:$0xff]
    %v83 = vld [vmem:[#allocation2 + $0x10] sm:$0xff]
    %v84 = vld [vmem:[#allocation2 + $0x18] sm:$0xff]
    %v85 = vld [vmem:[#allocation2 + $0x20] sm:$0xff]
    %v86 = vld [vmem:[#allocation2 + $0x28] sm:$0xff]
    %v87 = vld [vmem:[#allocation2 + $0x30] sm:$0xff]
    %v88 = vld [vmem:[#allocation2 + $0x38] sm:$0xff]
    %v89 = vmul.f32 %v81, 2.828427
    %v90 = vmul.f32 %v82, 2.828427
    %v91 = vmul.f32 %v83, 2.828427
    %v92 = vmul.f32 %v84, 2.828427
    %v93 = vmul.f32 %v85, 2.828427
    %v94 = vmul.f32 %v86, 2.828427
    %v95 = vmul.f32 %v87, 2.828427
    %v96 = vmul.f32 %v88, 2.828427
    %v97 = vld [vmem:[#allocation5] sm:$0xff]
    %v98 = vld [vmem:[#allocation5 + $0x8] sm:$0xff]
    %v99 = vld [vmem:[#allocation5 + $0x10] sm:$0xff]
    %v100 = vld [vmem:[#allocation5 + $0x18] sm:$0xff]
    %v101 = vld [vmem:[#allocation5 + $0x20] sm:$0xff]
    %v102 = vld [vmem:[#allocation5 + $0x28] sm:$0xff]
    %v103 = vld [vmem:[#allocation5 + $0x30] sm:$0xff]
    %v104 = vld [vmem:[#allocation5 + $0x38] sm:$0xff]
    %v105 = vld [vmem:[#allocation7] sm:$0xff]
    %v106 = vld [vmem:[#allocation7 + $0x8] sm:$0xff]
    %v107 = vld [vmem:[#allocation7 + $0x10] sm:$0xff]
    %v108 = vld [vmem:[#allocation7 + $0x18] sm:$0xff]
    %v109 = vld [vmem:[#allocation7 + $0x20] sm:$0xff]
    %v110 = vld [vmem:[#allocation7 + $0x28] sm:$0xff]
    %v111 = vld [vmem:[#allocation7 + $0x30] sm:$0xff]
    %v112 = vld [vmem:[#allocation7 + $0x38] sm:$0xff]
    %vm113 = vcmask 130048
    %v115 = vsel %vm113, %v89, 0
    %v118 = vsel %vm113, %v97, 0
    %120 = vmatpush.xpose.msra.mxu0 0.0
    %121 = vmatpush.xpose.msra.mxu0 0.0
    %122 = vmatpush.xpose.msra.mxu0 0.0
    %123 = vmatpush.xpose.msra.mxu0 0.0
    %124 = vmatpush.xpose.msra.mxu0 0.0
    %125 = vmatpush.xpose.msra.mxu0 0.0
    %126 = vmatpush.xpose.msra.mxu0 0.0
    %127 = vmatpush.xpose.msra.mxu0 0.0
    %128 = vmatpush.xpose.msra.mxu0 0.0
    %129 = vmatpush.xpose.msra.mxu0 0.0
    %130 = vmatpush.xpose.msra.mxu0 0.0
    %131 = vmatpush.xpose.msra.mxu0 0.0
    %132 = vmatpush.xpose.msra.mxu0 0.0
    %133 = vmatpush.xpose.msra.mxu0 0.0
    %134 = vmatpush.xpose.msra.mxu0 0.0
    %135 = vmatpush.xpose.msra.mxu0 %v118
    %136 = vmatmul.f32.gmra.mxu0 %v115
    %v137 = vpop.f32.mrf.mxu0
    %v138 = vadd.f32 0.0, %v137
    %139 = vdwg.mxu0
    %v141 = vsel %vm113, %v90, 0
    %v144 = vsel %vm113, %v98, 0
    %146 = vmatpush.xpose.msra.mxu0 0.0
    %147 = vmatpush.xpose.msra.mxu0 0.0
    %148 = vmatpush.xpose.msra.mxu0 0.0
    %149 = vmatpush.xpose.msra.mxu0 0.0
    %150 = vmatpush.xpose.msra.mxu0 0.0
    %151 = vmatpush.xpose.msra.mxu0 0.0
    %152 = vmatpush.xpose.msra.mxu0 0.0
    %153 = vmatpush.xpose.msra.mxu0 0.0
    %154 = vmatpush.xpose.msra.mxu0 0.0
    %155 = vmatpush.xpose.msra.mxu0 0.0
    %156 = vmatpush.xpose.msra.mxu0 0.0
    %157 = vmatpush.xpose.msra.mxu0 0.0
    %158 = vmatpush.xpose.msra.mxu0 0.0
    %159 = vmatpush.xpose.msra.mxu0 0.0
    %160 = vmatpush.xpose.msra.mxu0 0.0
    %161 = vmatpush.xpose.msra.mxu0 %v144
    %162 = vmatmul.f32.gmra.mxu0 %v141
    %v163 = vpop.f32.mrf.mxu0
    %v164 = vadd.f32 0.0, %v163
    %165 = vdwg.mxu0
    %v167 = vsel %vm113, %v91, 0
    %v170 = vsel %vm113, %v99, 0
    %172 = vmatpush.xpose.msra.mxu0 0.0
    %173 = vmatpush.xpose.msra.mxu0 0.0
    %174 = vmatpush.xpose.msra.mxu0 0.0
    %175 = vmatpush.xpose.msra.mxu0 0.0
    %176 = vmatpush.xpose.msra.mxu0 0.0
    %177 = vmatpush.xpose.msra.mxu0 0.0
    %178 = vmatpush.xpose.msra.mxu0 0.0
    %179 = vmatpush.xpose.msra.mxu0 0.0
    %180 = vmatpush.xpose.msra.mxu0 0.0
    %181 = vmatpush.xpose.msra.mxu0 0.0
    %182 = vmatpush.xpose.msra.mxu0 0.0
    %183 = vmatpush.xpose.msra.mxu0 0.0
    %184 = vmatpush.xpose.msra.mxu0 0.0
    %185 = vmatpush.xpose.msra.mxu0 0.0
    %186 = vmatpush.xpose.msra.mxu0 0.0
    %187 = vmatpush.xpose.msra.mxu0 %v170
    %188 = vmatmul.f32.gmra.mxu0 %v167
    %v189 = vpop.f32.mrf.mxu0
    %v190 = vadd.f32 0.0, %v189
    %191 = vdwg.mxu0
    %v193 = vsel %vm113, %v92, 0
    %v196 = vsel %vm113, %v100, 0
    %198 = vmatpush.xpose.msra.mxu0 0.0
    %199 = vmatpush.xpose.msra.mxu0 0.0
    %200 = vmatpush.xpose.msra.mxu0 0.0
    %201 = vmatpush.xpose.msra.mxu0 0.0
    %202 = vmatpush.xpose.msra.mxu0 0.0
    %203 = vmatpush.xpose.msra.mxu0 0.0
    %204 = vmatpush.xpose.msra.mxu0 0.0
    %205 = vmatpush.xpose.msra.mxu0 0.0
    %206 = vmatpush.xpose.msra.mxu0 0.0
    %207 = vmatpush.xpose.msra.mxu0 0.0
    %208 = vmatpush.xpose.msra.mxu0 0.0
    %209 = vmatpush.xpose.msra.mxu0 0.0
    %210 = vmatpush.xpose.msra.mxu0 0.0
    %211 = vmatpush.xpose.msra.mxu0 0.0
    %212 = vmatpush.xpose.msra.mxu0 0.0
    %213 = vmatpush.xpose.msra.mxu0 %v196
    %214 = vmatmul.f32.gmra.mxu0 %v193
    %v215 = vpop.f32.mrf.mxu0
    %v216 = vadd.f32 0.0, %v215
    %217 = vdwg.mxu0
    %v219 = vsel %vm113, %v93, 0
    %v222 = vsel %vm113, %v101, 0
    %224 = vmatpush.xpose.msra.mxu0 0.0
    %225 = vmatpush.xpose.msra.mxu0 0.0
    %226 = vmatpush.xpose.msra.mxu0 0.0
    %227 = vmatpush.xpose.msra.mxu0 0.0
    %228 = vmatpush.xpose.msra.mxu0 0.0
    %229 = vmatpush.xpose.msra.mxu0 0.0
    %230 = vmatpush.xpose.msra.mxu0 0.0
    %231 = vmatpush.xpose.msra.mxu0 0.0
    %232 = vmatpush.xpose.msra.mxu0 0.0
    %233 = vmatpush.xpose.msra.mxu0 0.0
    %234 = vmatpush.xpose.msra.mxu0 0.0
    %235 = vmatpush.xpose.msra.mxu0 0.0
    %236 = vmatpush.xpose.msra.mxu0 0.0
    %237 = vmatpush.xpose.msra.mxu0 0.0
    %238 = vmatpush.xpose.msra.mxu0 0.0
    %239 = vmatpush.xpose.msra.mxu0 %v222
    %240 = vmatmul.f32.gmra.mxu0 %v219
    %v241 = vpop.f32.mrf.mxu0
    %v242 = vadd.f32 0.0, %v241
    %243 = vdwg.mxu0
    %v245 = vsel %vm113, %v94, 0
    %v248 = vsel %vm113, %v102, 0
    %250 = vmatpush.xpose.msra.mxu0 0.0
    %251 = vmatpush.xpose.msra.mxu0 0.0
    %252 = vmatpush.xpose.msra.mxu0 0.0
    %253 = vmatpush.xpose.msra.mxu0 0.0
    %254 = vmatpush.xpose.msra.mxu0 0.0
    %255 = vmatpush.xpose.msra.mxu0 0.0
    %256 = vmatpush.xpose.msra.mxu0 0.0
    %257 = vmatpush.xpose.msra.mxu0 0.0
    %258 = vmatpush.xpose.msra.mxu0 0.0
    %259 = vmatpush.xpose.msra.mxu0 0.0
    %260 = vmatpush.xpose.msra.mxu0 0.0
    %261 = vmatpush.xpose.msra.mxu0 0.0
    %262 = vmatpush.xpose.msra.mxu0 0.0
    %263 = vmatpush.xpose.msra.mxu0 0.0
    %264 = vmatpush.xpose.msra.mxu0 0.0
    %265 = vmatpush.xpose.msra.mxu0 %v248
    %266 = vmatmul.f32.gmra.mxu0 %v245
    %v267 = vpop.f32.mrf.mxu0
    %v268 = vadd.f32 0.0, %v267
    %269 = vdwg.mxu0
    %v271 = vsel %vm113, %v95, 0
    %v274 = vsel %vm113, %v103, 0
    %276 = vmatpush.xpose.msra.mxu0 0.0
    %277 = vmatpush.xpose.msra.mxu0 0.0
    %278 = vmatpush.xpose.msra.mxu0 0.0
    %279 = vmatpush.xpose.msra.mxu0 0.0
    %280 = vmatpush.xpose.msra.mxu0 0.0
    %281 = vmatpush.xpose.msra.mxu0 0.0
    %282 = vmatpush.xpose.msra.mxu0 0.0
    %283 = vmatpush.xpose.msra.mxu0 0.0
    %284 = vmatpush.xpose.msra.mxu0 0.0
    %285 = vmatpush.xpose.msra.mxu0 0.0
    %286 = vmatpush.xpose.msra.mxu0 0.0
    %287 = vmatpush.xpose.msra.mxu0 0.0
    %288 = vmatpush.xpose.msra.mxu0 0.0
    %289 = vmatpush.xpose.msra.mxu0 0.0
    %290 = vmatpush.xpose.msra.mxu0 0.0
    %291 = vmatpush.xpose.msra.mxu0 %v274
    %292 = vmatmul.f32.gmra.mxu0 %v271
    %v293 = vpop.f32.mrf.mxu0
    %v294 = vadd.f32 0.0, %v293
    %295 = vdwg.mxu0
    %v297 = vsel %vm113, %v96, 0
    %v300 = vsel %vm113, %v104, 0
    %302 = vmatpush.xpose.msra.mxu0 0.0
    %303 = vmatpush.xpose.msra.mxu0 0.0
    %304 = vmatpush.xpose.msra.mxu0 0.0
    %305 = vmatpush.xpose.msra.mxu0 0.0
    %306 = vmatpush.xpose.msra.mxu0 0.0
    %307 = vmatpush.xpose.msra.mxu0 0.0
    %308 = vmatpush.xpose.msra.mxu0 0.0
    %309 = vmatpush.xpose.msra.mxu0 0.0
    %310 = vmatpush.xpose.msra.mxu0 0.0
    %311 = vmatpush.xpose.msra.mxu0 0.0
    %312 = vmatpush.xpose.msra.mxu0 0.0
    %313 = vmatpush.xpose.msra.mxu0 0.0
    %314 = vmatpush.xpose.msra.mxu0 0.0
    %315 = vmatpush.xpose.msra.mxu0 0.0
    %316 = vmatpush.xpose.msra.mxu0 0.0
    %317 = vmatpush.xpose.msra.mxu0 %v300
    %318 = vmatmul.f32.gmra.mxu0 %v297
    %v319 = vpop.f32.mrf.mxu0
    %v320 = vadd.f32 0.0, %v319
    %321 = vdwg.mxu0
    %vm322 = vcmask 64512
    %v323 = vsel %vm322, %v138, -inf
    %324 = vmax.xlane.f32.xlu0 %v323
    %v325 = vpop.xlane.xlu0 %324
    %v326 = vsel %vm322, %v164, -inf
    %327 = vmax.xlane.f32.xlu0 %v326
    %v328 = vpop.xlane.xlu0 %327
    %v329 = vsel %vm322, %v190, -inf
    %330 = vmax.xlane.f32.xlu0 %v329
    %v331 = vpop.xlane.xlu0 %330
    %v332 = vsel %vm322, %v216, -inf
    %333 = vmax.xlane.f32.xlu0 %v332
    %v334 = vpop.xlane.xlu0 %333
    %v335 = vsel %vm322, %v242, -inf
    %336 = vmax.xlane.f32.xlu0 %v335
    %v337 = vpop.xlane.xlu0 %336
    %v338 = vsel %vm322, %v268, -inf
    %339 = vmax.xlane.f32.xlu0 %v338
    %v340 = vpop.xlane.xlu0 %339
    %v341 = vsel %vm322, %v294, -inf
    %342 = vmax.xlane.f32.xlu0 %v341
    %v343 = vpop.xlane.xlu0 %342
    %v344 = vsel %vm322, %v320, -inf
    %345 = vmax.xlane.f32.xlu0 %v344
    %v346 = vpop.xlane.xlu0 %345
    %v347 = vsub.f32 %v138, %v325
    %v348 = vsub.f32 %v164, %v328
    %v349 = vsub.f32 %v190, %v331
    %v350 = vsub.f32 %v216, %v334
    %v351 = vsub.f32 %v242, %v337
    %v352 = vsub.f32 %v268, %v340
    %v353 = vsub.f32 %v294, %v343
    %v354 = vsub.f32 %v320, %v346
    %v355 = vmul.f32 %v347, 1.442695
    %v356 = vpow.pop %v355
    %v357 = vmul.f32 %v348, 1.442695
    %v358 = vpow.pop %v357
    %v359 = vmul.f32 %v349, 1.442695
    %v360 = vpow.pop %v359
    %v361 = vmul.f32 %v350, 1.442695
    %v362 = vpow.pop %v361
    %v363 = vmul.f32 %v351, 1.442695
    %v364 = vpow.pop %v363
    %v365 = vmul.f32 %v352, 1.442695
    %v366 = vpow.pop %v365
    %v367 = vmul.f32 %v353, 1.442695
    %v368 = vpow.pop %v367
    %v369 = vmul.f32 %v354, 1.442695
    %v370 = vpow.pop %v369
    %v371 = vsel %vm322, %v356, 0.0
    %372 = vadd.xlane.f32.xlu0 %v371
    %v373 = vpop.xlane.xlu0 %372
    %v374 = vsel %vm322, %v358, 0.0
    %375 = vadd.xlane.f32.xlu0 %v374
    %v376 = vpop.xlane.xlu0 %375
    %v377 = vsel %vm322, %v360, 0.0
    %378 = vadd.xlane.f32.xlu0 %v377
    %v379 = vpop.xlane.xlu0 %378
    %v380 = vsel %vm322, %v362, 0.0
    %381 = vadd.xlane.f32.xlu0 %v380
    %v382 = vpop.xlane.xlu0 %381
    %v383 = vsel %vm322, %v364, 0.0
    %384 = vadd.xlane.f32.xlu0 %v383
    %v385 = vpop.xlane.xlu0 %384
    %v386 = vsel %vm322, %v366, 0.0
    %387 = vadd.xlane.f32.xlu0 %v386
    %v388 = vpop.xlane.xlu0 %387
    %v389 = vsel %vm322, %v368, 0.0
    %390 = vadd.xlane.f32.xlu0 %v389
    %v391 = vpop.xlane.xlu0 %390
    %v392 = vsel %vm322, %v370, 0.0
    %393 = vadd.xlane.f32.xlu0 %v392
    %v394 = vpop.xlane.xlu0 %393
    %v395 = vrcp.pop %v373
    %v396 = vmul.f32 %v373, %v395
    %v397 = vsub.f32 1.0, %v396
    %v398 = vmul.f32 %v395, %v397
    %v399 = vadd.f32 %v395, %v398
    %vm400 = vweird.f32 %v373
    %vm401 = vweird.f32 %v395
    %vm402 = vmor %vm400, %vm401
    %v403 = vsel %vm402, %v395, %v399
    %v404 = vand.u32 2147483647, %v373
    %vm405 = vcmp.eq.f32.partialorder %v404, 8.507059e+37
    %v406 = vand.u32 %v373, 2147483648
    %v407 = vor.u32 1.1754944e-38, %v406
    %v408 = vsel %vm405, %v407, %v403
    %v409 = vmul.f32 %v356, %v408
    %v410 = vrcp.pop %v376
    %v411 = vmul.f32 %v376, %v410
    %v412 = vsub.f32 1.0, %v411
    %v413 = vmul.f32 %v410, %v412
    %v414 = vadd.f32 %v410, %v413
    %vm415 = vweird.f32 %v376
    %vm416 = vweird.f32 %v410
    %vm417 = vmor %vm415, %vm416
    %v418 = vsel %vm417, %v410, %v414
    %v419 = vand.u32 2147483647, %v376
    %vm420 = vcmp.eq.f32.partialorder %v419, 8.507059e+37
    %v421 = vand.u32 %v376, 2147483648
    %v422 = vor.u32 1.1754944e-38, %v421
    %v423 = vsel %vm420, %v422, %v418
    %v424 = vmul.f32 %v358, %v423
    %v425 = vrcp.pop %v379
    %v426 = vmul.f32 %v379, %v425
    %v427 = vsub.f32 1.0, %v426
    %v428 = vmul.f32 %v425, %v427
    %v429 = vadd.f32 %v425, %v428
    %vm430 = vweird.f32 %v379
    %vm431 = vweird.f32 %v425
    %vm432 = vmor %vm430, %vm431
    %v433 = vsel %vm432, %v425, %v429
    %v434 = vand.u32 2147483647, %v379
    %vm435 = vcmp.eq.f32.partialorder %v434, 8.507059e+37
    %v436 = vand.u32 %v379, 2147483648
    %v437 = vor.u32 1.1754944e-38, %v436
    %v438 = vsel %vm435, %v437, %v433
    %v439 = vmul.f32 %v360, %v438
    %v440 = vrcp.pop %v382
    %v441 = vmul.f32 %v382, %v440
    %v442 = vsub.f32 1.0, %v441
    %v443 = vmul.f32 %v440, %v442
    %v444 = vadd.f32 %v440, %v443
    %vm445 = vweird.f32 %v382
    %vm446 = vweird.f32 %v440
    %vm447 = vmor %vm445, %vm446
    %v448 = vsel %vm447, %v440, %v444
    %v449 = vand.u32 2147483647, %v382
    %vm450 = vcmp.eq.f32.partialorder %v449, 8.507059e+37
    %v451 = vand.u32 %v382, 2147483648
    %v452 = vor.u32 1.1754944e-38, %v451
    %v453 = vsel %vm450, %v452, %v448
    %v454 = vmul.f32 %v362, %v453
    %v455 = vrcp.pop %v385
    %v456 = vmul.f32 %v385, %v455
    %v457 = vsub.f32 1.0, %v456
    %v458 = vmul.f32 %v455, %v457
    %v459 = vadd.f32 %v455, %v458
    %vm460 = vweird.f32 %v385
    %vm461 = vweird.f32 %v455
    %vm462 = vmor %vm460, %vm461
    %v463 = vsel %vm462, %v455, %v459
    %v464 = vand.u32 2147483647, %v385
    %vm465 = vcmp.eq.f32.partialorder %v464, 8.507059e+37
    %v466 = vand.u32 %v385, 2147483648
    %v467 = vor.u32 1.1754944e-38, %v466
    %v468 = vsel %vm465, %v467, %v463
    %v469 = vmul.f32 %v364, %v468
    %v470 = vrcp.pop %v388
    %v471 = vmul.f32 %v388, %v470
    %v472 = vsub.f32 1.0, %v471
    %v473 = vmul.f32 %v470, %v472
    %v474 = vadd.f32 %v470, %v473
    %vm475 = vweird.f32 %v388
    %vm476 = vweird.f32 %v470
    %vm477 = vmor %vm475, %vm476
    %v478 = vsel %vm477, %v470, %v474
    %v479 = vand.u32 2147483647, %v388
    %vm480 = vcmp.eq.f32.partialorder %v479, 8.507059e+37
    %v481 = vand.u32 %v388, 2147483648
    %v482 = vor.u32 1.1754944e-38, %v481
    %v483 = vsel %vm480, %v482, %v478
    %v484 = vmul.f32 %v366, %v483
    %v485 = vrcp.pop %v391
    %v486 = vmul.f32 %v391, %v485
    %v487 = vsub.f32 1.0, %v486
    %v488 = vmul.f32 %v485, %v487
    %v489 = vadd.f32 %v485, %v488
    %vm490 = vweird.f32 %v391
    %vm491 = vweird.f32 %v485
    %vm492 = vmor %vm490, %vm491
    %v493 = vsel %vm492, %v485, %v489
    %v494 = vand.u32 2147483647, %v391
    %vm495 = vcmp.eq.f32.partialorder %v494, 8.507059e+37
    %v496 = vand.u32 %v391, 2147483648
    %v497 = vor.u32 1.1754944e-38, %v496
    %v498 = vsel %vm495, %v497, %v493
    %v499 = vmul.f32 %v368, %v498
    %v500 = vrcp.pop %v394
    %v501 = vmul.f32 %v394, %v500
    %v502 = vsub.f32 1.0, %v501
    %v503 = vmul.f32 %v500, %v502
    %v504 = vadd.f32 %v500, %v503
    %vm505 = vweird.f32 %v394
    %vm506 = vweird.f32 %v500
    %vm507 = vmor %vm505, %vm506
    %v508 = vsel %vm507, %v500, %v504
    %v509 = vand.u32 2147483647, %v394
    %vm510 = vcmp.eq.f32.partialorder %v509, 8.507059e+37
    %v511 = vand.u32 %v394, 2147483648
    %v512 = vor.u32 1.1754944e-38, %v511
    %v513 = vsel %vm510, %v512, %v508
    %v514 = vmul.f32 %v370, %v513
    %v515 = vld [vmem:[#allocation8] sm:$0xff]
    %v516 = vld [vmem:[#allocation8 + $0x8] sm:$0xff]
    %v517 = vld [vmem:[#allocation8 + $0x10] sm:$0xff]
    %v518 = vld [vmem:[#allocation8 + $0x18] sm:$0xff]
    %v519 = vld [vmem:[#allocation8 + $0x20] sm:$0xff]
    %v520 = vld [vmem:[#allocation8 + $0x28] sm:$0xff]
    %v521 = vld [vmem:[#allocation8 + $0x30] sm:$0xff]
    %v522 = vld [vmem:[#allocation8 + $0x38] sm:$0xff]
    %vm523 = vcmp.ge.s32.totalorder %v515, 0
    %vm524 = vcmp.ge.s32.totalorder %v516, 0
    %vm525 = vcmp.ge.s32.totalorder %v517, 0
    %vm526 = vcmp.ge.s32.totalorder %v518, 0
    %vm527 = vcmp.ge.s32.totalorder %v519, 0
    %vm528 = vcmp.ge.s32.totalorder %v520, 0
    %vm529 = vcmp.ge.s32.totalorder %v521, 0
    %vm530 = vcmp.ge.s32.totalorder %v522, 0
    %v531 = vsel %vm523, %v409, 0.0
    %v532 = vsel %vm524, %v424, 0.0
    %v533 = vsel %vm525, %v439, 0.0
    %v534 = vsel %vm526, %v454, 0.0
    %v535 = vsel %vm527, %v469, 0.0
    %v536 = vsel %vm528, %v484, 0.0
    %v537 = vsel %vm529, %v499, 0.0
    %v538 = vsel %vm530, %v514, 0.0
    %v540 = vsel %vm322, %v531, 0
    %542 = vmatpush.msra.mxu0 0.0
    %543 = vmatpush.msra.mxu0 0.0
    %544 = vmatpush.msra.mxu0 0.0
    %545 = vmatpush.msra.mxu0 0.0
    %546 = vmatpush.msra.mxu0 0.0
    %547 = vmatpush.msra.mxu0 0.0
    %548 = vmatpush.msra.mxu0 0.0
    %549 = vmatpush.msra.mxu0 0.0
    %550 = vmatpush.msra.mxu0 0.0
    %551 = vmatpush.msra.mxu0 0.0
    %552 = vmatpush.msra.mxu0 0.0
    %553 = vmatpush.msra.mxu0 0.0
    %554 = vmatpush.msra.mxu0 0.0
    %555 = vmatpush.msra.mxu0 0.0
    %556 = vmatpush.msra.mxu0 0.0
    %557 = vmatpush.msra.mxu0 %v105
    %558 = vmatmul.f32.gmra.mxu0 %v540
    %v559 = vpop.f32.mrf.mxu0
    %v560 = vadd.f32 0.0, %v559
    %561 = vdwg.mxu0
    %v563 = vsel %vm322, %v532, 0
    %565 = vmatpush.msra.mxu0 0.0
    %566 = vmatpush.msra.mxu0 0.0
    %567 = vmatpush.msra.mxu0 0.0
    %568 = vmatpush.msra.mxu0 0.0
    %569 = vmatpush.msra.mxu0 0.0
    %570 = vmatpush.msra.mxu0 0.0
    %571 = vmatpush.msra.mxu0 0.0
    %572 = vmatpush.msra.mxu0 0.0
    %573 = vmatpush.msra.mxu0 0.0
    %574 = vmatpush.msra.mxu0 0.0
    %575 = vmatpush.msra.mxu0 0.0
    %576 = vmatpush.msra.mxu0 0.0
    %577 = vmatpush.msra.mxu0 0.0
    %578 = vmatpush.msra.mxu0 0.0
    %579 = vmatpush.msra.mxu0 0.0
    %580 = vmatpush.msra.mxu0 %v106
    %581 = vmatmul.f32.gmra.mxu0 %v563
    %v582 = vpop.f32.mrf.mxu0
    %v583 = vadd.f32 0.0, %v582
    %584 = vdwg.mxu0
    %v586 = vsel %vm322, %v533, 0
    %588 = vmatpush.msra.mxu0 0.0
    %589 = vmatpush.msra.mxu0 0.0
    %590 = vmatpush.msra.mxu0 0.0
    %591 = vmatpush.msra.mxu0 0.0
    %592 = vmatpush.msra.mxu0 0.0
    %593 = vmatpush.msra.mxu0 0.0
    %594 = vmatpush.msra.mxu0 0.0
    %595 = vmatpush.msra.mxu0 0.0
    %596 = vmatpush.msra.mxu0 0.0
    %597 = vmatpush.msra.mxu0 0.0
    %598 = vmatpush.msra.mxu0 0.0
    %599 = vmatpush.msra.mxu0 0.0
    %600 = vmatpush.msra.mxu0 0.0
    %601 = vmatpush.msra.mxu0 0.0
    %602 = vmatpush.msra.mxu0 0.0
    %603 = vmatpush.msra.mxu0 %v107
    %604 = vmatmul.f32.gmra.mxu0 %v586
    %v605 = vpop.f32.mrf.mxu0
    %v606 = vadd.f32 0.0, %v605
    %607 = vdwg.mxu0
    %v609 = vsel %vm322, %v534, 0
    %611 = vmatpush.msra.mxu0 0.0
    %612 = vmatpush.msra.mxu0 0.0
    %613 = vmatpush.msra.mxu0 0.0
    %614 = vmatpush.msra.mxu0 0.0
    %615 = vmatpush.msra.mxu0 0.0
    %616 = vmatpush.msra.mxu0 0.0
    %617 = vmatpush.msra.mxu0 0.0
    %618 = vmatpush.msra.mxu0 0.0
    %619 = vmatpush.msra.mxu0 0.0
    %620 = vmatpush.msra.mxu0 0.0
    %621 = vmatpush.msra.mxu0 0.0
    %622 = vmatpush.msra.mxu0 0.0
    %623 = vmatpush.msra.mxu0 0.0
    %624 = vmatpush.msra.mxu0 0.0
    %625 = vmatpush.msra.mxu0 0.0
    %626 = vmatpush.msra.mxu0 %v108
    %627 = vmatmul.f32.gmra.mxu0 %v609
    %v628 = vpop.f32.mrf.mxu0
    %v629 = vadd.f32 0.0, %v628
    %630 = vdwg.mxu0
    %v632 = vsel %vm322, %v535, 0
    %634 = vmatpush.msra.mxu0 0.0
    %635 = vmatpush.msra.mxu0 0.0
    %636 = vmatpush.msra.mxu0 0.0
    %637 = vmatpush.msra.mxu0 0.0
    %638 = vmatpush.msra.mxu0 0.0
    %639 = vmatpush.msra.mxu0 0.0
    %640 = vmatpush.msra.mxu0 0.0
    %641 = vmatpush.msra.mxu0 0.0
    %642 = vmatpush.msra.mxu0 0.0
    %643 = vmatpush.msra.mxu0 0.0
    %644 = vmatpush.msra.mxu0 0.0
    %645 = vmatpush.msra.mxu0 0.0
    %646 = vmatpush.msra.mxu0 0.0
    %647 = vmatpush.msra.mxu0 0.0
    %648 = vmatpush.msra.mxu0 0.0
    %649 = vmatpush.msra.mxu0 %v109
    %650 = vmatmul.f32.gmra.mxu0 %v632
    %v651 = vpop.f32.mrf.mxu0
    %v652 = vadd.f32 0.0, %v651
    %653 = vdwg.mxu0
    %v655 = vsel %vm322, %v536, 0
    %657 = vmatpush.msra.mxu0 0.0
    %658 = vmatpush.msra.mxu0 0.0
    %659 = vmatpush.msra.mxu0 0.0
    %660 = vmatpush.msra.mxu0 0.0
    %661 = vmatpush.msra.mxu0 0.0
    %662 = vmatpush.msra.mxu0 0.0
    %663 = vmatpush.msra.mxu0 0.0
    %664 = vmatpush.msra.mxu0 0.0
    %665 = vmatpush.msra.mxu0 0.0
    %666 = vmatpush.msra.mxu0 0.0
    %667 = vmatpush.msra.mxu0 0.0
    %668 = vmatpush.msra.mxu0 0.0
    %669 = vmatpush.msra.mxu0 0.0
    %670 = vmatpush.msra.mxu0 0.0
    %671 = vmatpush.msra.mxu0 0.0
    %672 = vmatpush.msra.mxu0 %v110
    %673 = vmatmul.f32.gmra.mxu0 %v655
    %v674 = vpop.f32.mrf.mxu0
    %v675 = vadd.f32 0.0, %v674
    %676 = vdwg.mxu0
    %v678 = vsel %vm322, %v537, 0
    %680 = vmatpush.msra.mxu0 0.0
    %681 = vmatpush.msra.mxu0 0.0
    %682 = vmatpush.msra.mxu0 0.0
    %683 = vmatpush.msra.mxu0 0.0
    %684 = vmatpush.msra.mxu0 0.0
    %685 = vmatpush.msra.mxu0 0.0
    %686 = vmatpush.msra.mxu0 0.0
    %687 = vmatpush.msra.mxu0 0.0
    %688 = vmatpush.msra.mxu0 0.0
    %689 = vmatpush.msra.mxu0 0.0
    %690 = vmatpush.msra.mxu0 0.0
    %691 = vmatpush.msra.mxu0 0.0
    %692 = vmatpush.msra.mxu0 0.0
    %693 = vmatpush.msra.mxu0 0.0
    %694 = vmatpush.msra.mxu0 0.0
    %695 = vmatpush.msra.mxu0 %v111
    %696 = vmatmul.f32.gmra.mxu0 %v678
    %v697 = vpop.f32.mrf.mxu0
    %v698 = vadd.f32 0.0, %v697
    %699 = vdwg.mxu0
    %v701 = vsel %vm322, %v538, 0
    %703 = vmatpush.msra.mxu0 0.0
    %704 = vmatpush.msra.mxu0 0.0
    %705 = vmatpush.msra.mxu0 0.0
    %706 = vmatpush.msra.mxu0 0.0
    %707 = vmatpush.msra.mxu0 0.0
    %708 = vmatpush.msra.mxu0 0.0
    %709 = vmatpush.msra.mxu0 0.0
    %710 = vmatpush.msra.mxu0 0.0
    %711 = vmatpush.msra.mxu0 0.0
    %712 = vmatpush.msra.mxu0 0.0
    %713 = vmatpush.msra.mxu0 0.0
    %714 = vmatpush.msra.mxu0 0.0
    %715 = vmatpush.msra.mxu0 0.0
    %716 = vmatpush.msra.mxu0 0.0
    %717 = vmatpush.msra.mxu0 0.0
    %718 = vmatpush.msra.mxu0 %v112
    %719 = vmatmul.f32.gmra.mxu0 %v701
    %v720 = vpop.f32.mrf.mxu0
    %v721 = vadd.f32 0.0, %v720
    %722 = vdwg.mxu0
    %v723 = vmul.f32 %v560, 2.0
    %v724 = vmul.f32 %v583, 2.0
    %v725 = vmul.f32 %v606, 2.0
    %v726 = vmul.f32 %v629, 2.0
    %v727 = vmul.f32 %v652, 2.0
    %v728 = vmul.f32 %v675, 2.0
    %v729 = vmul.f32 %v698, 2.0
    %v730 = vmul.f32 %v721, 2.0
    %731 = vst.msk [vmem:[#allocation10] sm:$0xff] %vm113, %v723
    %732 = vst.msk [vmem:[#allocation10 + $0x8] sm:$0xff] %vm113, %v724
    %733 = vst.msk [vmem:[#allocation10 + $0x10] sm:$0xff] %vm113, %v725
    %734 = vst.msk [vmem:[#allocation10 + $0x18] sm:$0xff] %vm113, %v726
    %735 = vst.msk [vmem:[#allocation10 + $0x20] sm:$0xff] %vm113, %v727
    %736 = vst.msk [vmem:[#allocation10 + $0x28] sm:$0xff] %vm113, %v728
    %737 = vst.msk [vmem:[#allocation10 + $0x30] sm:$0xff] %vm113, %v729
    %738 = vst.msk [vmem:[#allocation10 + $0x38] sm:$0xff] %vm113, %v730
    // Predicated region
    $region34: #{tpu_custom_call.1} parent=1 // pred_check
      _
    $region35: #{tpu_custom_call.1} parent=1 // pred_check_branch
      %740 = sbr.rel (0) target = $region37
    $region36: #{tpu_custom_call.1} parent=1 // pred_region
      %742 = vsyncadd [#allocation4], 0
      %s743 = sshll.u32 [#allocation10], 4
      %s744 = int_to_ptr.vmem [resolvable:$true] %s743
      %s745 = sshll.u32 %s4, 4
      %s746 = int_to_ptr.hbm [resolvable:$true] %s745
      %751 = dma.vmem_to_hbm [thread:$0]  %s744, 1024, %s746, [#allocation4], 128, 128, 8
    $region37: #{tpu_custom_call.1} parent=1 // pred_fallthru
      _
    // Predicated region
    $region38: #{tpu_custom_call.1} parent=1 // pred_check
      _
    $region39: #{tpu_custom_call.1} parent=1 // pred_check_branch
      %753 = sbr.rel (0) target = $region41
    $region40: #{tpu_custom_call.1} parent=1 // pred_region
      %755 = dma.done [#allocation4], 1024
    $region41: #{tpu_custom_call.1} parent=1 // pred_fallthru
      _
    %756 = vsyncpa [#allocation3], 1
    %757 = vsyncpa [#allocation6], 1
    %758 = vsyncpa [#allocation9], 1
    %759 = vsyncpa [#allocation4], 1

</llo_original>
